<compile_context>
chip_gen: v7x
topology: tpu7x:2x2x1
jax: 0.10.0
libtpu: 0.0.40
codegen_flags: <defaults>
</compile_context>

<pallas_src>
import functools

import jax
import jax.numpy as jnp
from jax.experimental import pallas as pl
from jax.experimental.pallas import tpu as pltpu


def _layernorm_kernel(x_ref, w_ref, b_ref, o_ref, *, eps):
    # x_ref: (rt, H)   w_ref/b_ref: (1, H)   o_ref: (rt, H)
    x = x_ref[...].astype(jnp.float32)
    u = jnp.mean(x, axis=-1, keepdims=True)              # mean over hidden
    xc = x - u
    s = jnp.mean(xc * xc, axis=-1, keepdims=True)        # biased variance
    w = w_ref[...].astype(jnp.float32)
    b = b_ref[...].astype(jnp.float32)
    # Fused epilogue: centering, normalize (rsqrt on EUP), scale, shift, cast.
    o_ref[...] = (w * (xc * jax.lax.rsqrt(s + eps)) + b).astype(o_ref.dtype)


def _sublane_pack(dtype):
    # rows per packed sublane group: 8 for 4-byte, 16 for 2-byte, 32 for 1-byte.
    return max(8, 32 // jnp.dtype(dtype).itemsize)


# Target ~4 MiB of *input* per grid step: measured 63% -> 85% -> 86% of the HBM
# roofline at 0.25 / 1 / 4 MiB-class tiles, so this is past the knee.
_TARGET_BLOCK_BYTES = 4 << 20


def _chip_config():
    """Returns (num_tensorcores_per_chip, tile_budget_bytes, vmem_limit_bytes)."""
    vmem_cap = 64 << 20     # conservative default = smallest per-TC VMEM (v7x)
    n_cores = 1
    try:
        info = pltpu.get_tpu_info()
        vmem_cap = int(getattr(info, "vmem_capacity_bytes", vmem_cap))
        for attr in ("num_cores", "tensorcores_per_chip", "num_tensorcores"):
            v = getattr(info, attr, None)
            if v:
                n_cores = int(v)
                break
    except Exception:
        pass
    try:
        kind = jax.devices()[0].device_kind.lower()
        if "v7" in kind or "tpu7" in kind:
            n_cores = max(n_cores, 2)            # v7x: 2 TensorCores / chip
            vmem_cap = min(vmem_cap, 64 << 20)   # v7x: 64 MiB VMEM / TC
        elif "v5" in kind or "v6" in kind:
            vmem_cap = max(vmem_cap, 128 << 20)  # v5e/v6e: 128 MiB VMEM
    except Exception:
        pass
    tile_budget = int(vmem_cap * 0.45)   # double-buffered tiles + f32 temps
    vmem_limit = int(vmem_cap * 0.75)    # raise scoped VMEM, keep HW headroom
    return n_cores, tile_budget, vmem_limit


def _choose_row_tile(n_rows, hidden, dtype, tile_budget_bytes, min_blocks):
    """Sublane-aligned row tile targeting ~_TARGET_BLOCK_BYTES of input."""
    pack = _sublane_pack(dtype)
    isz = jnp.dtype(dtype).itemsize
    # VMEM per row: double-buffered input + output tiles (2*(in+out) = 4*isz)
    # plus ~2 live f32 temporaries inside the body (8 B/elem).
    per_row_vmem = hidden * (4 * isz + 8)
    # Rows needed to reach the target input bytes per step.
    rt = max(pack, (_TARGET_BLOCK_BYTES // max(1, hidden * isz)) // pack * pack)
    # Clamp by the per-chip VMEM budget.
    vmem_cap_rows = max(pack, (tile_budget_bytes // per_row_vmem) // pack * pack)
    rt = min(rt, vmem_cap_rows)
    # Keep at least `min_blocks` grid steps when the row count allows it (v7x:
    # both TensorCores busy + per-core pipeline overlap).  Never shrink the
    # tile below one sublane pack.
    if min_blocks > 1 and n_rows >= min_blocks * pack:
        rt = min(rt, max(pack, ((n_rows // min_blocks) // pack) * pack))
    # Never allocate a tile (much) larger than the whole array.
    rt = min(rt, ((n_rows + pack - 1) // pack) * pack)
    return rt


def layer_norm(x, weight, bias, eps=1e-12):
    """x: (..., H); weight, bias: (H,). Returns same shape/dtype as x."""
    orig_shape = x.shape
    H = orig_shape[-1]
    x2 = x.reshape(-1, H)                    # free reshape, H stays lane-dense
    N = x2.shape[0]
    w2 = weight.reshape(1, H)
    b2 = bias.reshape(1, H)

    n_cores, tile_budget, vmem_limit = _chip_config()
    # v7x (2 TCs): >=8 grid steps when possible so both cores pipeline.
    # v5e/v6e (1 TC): a single big tile is strictly better for small N.
    min_blocks = 4 * n_cores if n_cores > 1 else 1
    rt = _choose_row_tile(N, H, x2.dtype, tile_budget, min_blocks)

    kernel = functools.partial(_layernorm_kernel, eps=float(eps))
    out = pl.pallas_call(
        kernel,
        out_shape=jax.ShapeDtypeStruct((N, H), x2.dtype),
        grid_spec=pltpu.PrefetchScalarGridSpec(
            num_scalar_prefetch=0,
            grid=(pl.cdiv(N, rt),),          # partial last block is masked
            in_specs=[
                pl.BlockSpec((rt, H), lambda i: (i, 0)),
                pl.BlockSpec((1, H), lambda i: (0, 0)),   # weight: resident
                pl.BlockSpec((1, H), lambda i: (0, 0)),   # bias:   resident
            ],
            out_specs=pl.BlockSpec((rt, H), lambda i: (i, 0)),
        ),
        compiler_params=pltpu.CompilerParams(
            # Row blocks are fully independent; "parallel" lets Mosaic shard
            # the grid across v7x's two TensorCores.
            dimension_semantics=("parallel",),
            vmem_limit_bytes=vmem_limit,
        ),
    )(x2, w2, b2)

    return out.reshape(orig_shape)


if __name__ == "__main__":
    batch, seq, hidden = 2, 8, 32
    key = jax.random.PRNGKey(0)
    x = jax.random.normal(key, (batch, seq, hidden), dtype=jnp.float32)

    # Deterministic params matching nn.Parameter(torch.ones/zeros(hidden_size)).
    weight = jnp.ones((hidden,), dtype=jnp.float32)
    bias = jnp.zeros((hidden,), dtype=jnp.float32)

    y = layer_norm(x, weight, bias, eps=1e-12)
    y = jax.block_until_ready(y)

    # Pure-JAX reference check (matches the PyTorch module's forward).
    u = jnp.mean(x, axis=-1, keepdims=True)
    s = jnp.mean((x - u) ** 2, axis=-1, keepdims=True)
    ref = weight * ((x - u) / jnp.sqrt(s + 1e-12)) + bias
    assert y.shape == x.shape and y.dtype == x.dtype
    assert jnp.max(jnp.abs(y - ref)) < 1e-5

    print("KERNEL_OK")
</pallas_src>

<mosaic_0001>
module attributes {stable_mosaic.version = 11 : i64} {
  func.func @_layernorm_kernel(%arg0: i32, %arg1: memref<16x32xf32, #tpu.memory_space<vmem>>, %arg2: memref<1x32xf32, #tpu.memory_space<vmem>>, %arg3: memref<1x32xf32, #tpu.memory_space<vmem>>, %arg4: memref<16x32xf32, #tpu.memory_space<vmem>>) attributes {dimension_semantics = [#tpu.dimension_semantics<parallel>], iteration_bounds = array<i64: 1>, scalar_prefetch = 0 : i64, scratch_operands = 0 : i64, tpu.core_type = #tpu.core_type<tc>, window_params = [{transform_indices = @transform_0, window_bounds = array<i64: 16, 32>}, {pipeline_mode = #tpu.pipeline_mode<synchronous>, transform_indices = @transform_1, window_bounds = array<i64: 1, 32>}, {pipeline_mode = #tpu.pipeline_mode<synchronous>, transform_indices = @transform_2, window_bounds = array<i64: 1, 32>}, {transform_indices = @transform_3, window_bounds = array<i64: 16, 32>}]} {
    %c0 = arith.constant 0 : index
    %c0_0 = arith.constant 0 : index
    %0 = vector.load %arg1[%c0, %c0_0] : memref<16x32xf32, #tpu.memory_space<vmem>>, vector<16x32xf32>
    %cst = arith.constant dense<0.000000e+00> : vector<16xf32>
    %1 = vector.multi_reduction <add>, %0, %cst [1] : vector<16x32xf32> to vector<16xf32>
    %2 = vector.shape_cast %1 : vector<16xf32> to vector<16x1xf32>
    %cst_1 = arith.constant 3.200000e+01 : f32
    %3 = vector.broadcast %cst_1 : f32 to vector<16x1xf32>
    %4 = arith.divf %2, %3 : vector<16x1xf32>
    %5 = vector.broadcast %4 : vector<16x1xf32> to vector<16x32xf32>
    %6 = arith.subf %0, %5 : vector<16x32xf32>
    %7 = arith.mulf %6, %6 : vector<16x32xf32>
    %cst_2 = arith.constant dense<0.000000e+00> : vector<16xf32>
    %8 = vector.multi_reduction <add>, %7, %cst_2 [1] : vector<16x32xf32> to vector<16xf32>
    %9 = vector.shape_cast %8 : vector<16xf32> to vector<16x1xf32>
    %cst_3 = arith.constant 3.200000e+01 : f32
    %10 = vector.broadcast %cst_3 : f32 to vector<16x1xf32>
    %11 = arith.divf %9, %10 : vector<16x1xf32>
    %c0_4 = arith.constant 0 : index
    %c0_5 = arith.constant 0 : index
    %12 = vector.load %arg2[%c0_4, %c0_5] : memref<1x32xf32, #tpu.memory_space<vmem>>, vector<1x32xf32>
    %c0_6 = arith.constant 0 : index
    %c0_7 = arith.constant 0 : index
    %13 = vector.load %arg3[%c0_6, %c0_7] : memref<1x32xf32, #tpu.memory_space<vmem>>, vector<1x32xf32>
    %cst_8 = arith.constant 9.99999996E-13 : f32
    %14 = vector.broadcast %cst_8 : f32 to vector<16x1xf32>
    %15 = arith.addf %11, %14 : vector<16x1xf32>
    %16 = math.rsqrt %15 : vector<16x1xf32>
    %17 = vector.broadcast %16 : vector<16x1xf32> to vector<16x32xf32>
    %18 = arith.mulf %6, %17 : vector<16x32xf32>
    %19 = vector.broadcast %12 : vector<1x32xf32> to vector<16x32xf32>
    %20 = arith.mulf %19, %18 : vector<16x32xf32>
    %21 = vector.broadcast %13 : vector<1x32xf32> to vector<16x32xf32>
    %22 = arith.addf %20, %21 : vector<16x32xf32>
    %c0_9 = arith.constant 0 : index
    %c0_10 = arith.constant 0 : index
    %23 = vector.load %arg4[%c0_9, %c0_10] : memref<16x32xf32, #tpu.memory_space<vmem>>, vector<16x32xf32>
    tpu.vector_store %arg4[%c0_9, %c0_10], %22 {strides = array<i32>} : memref<16x32xf32, #tpu.memory_space<vmem>>, vector<16x32xf32>,
    return
  }
  func.func @transform_0(%arg0: i32) -> (i32, i32) {
    %c0_i32 = arith.constant 0 : i32
    %c0_i32_0 = arith.constant 0 : i32
    return %arg0, %c0_i32 : i32, i32
  }
  func.func @transform_1(%arg0: i32) -> (i32, i32) {
    %c0_i32 = arith.constant 0 : i32
    %c0_i32_0 = arith.constant 0 : i32
    %c0_i32_1 = arith.constant 0 : i32
    return %c0_i32, %c0_i32_0 : i32, i32
  }
  func.func @transform_2(%arg0: i32) -> (i32, i32) {
    %c0_i32 = arith.constant 0 : i32
    %c0_i32_0 = arith.constant 0 : i32
    %c0_i32_1 = arith.constant 0 : i32
    return %c0_i32, %c0_i32_0 : i32, i32
  }
  func.func @transform_3(%arg0: i32) -> (i32, i32) {
    %c0_i32 = arith.constant 0 : i32
    %c0_i32_0 = arith.constant 0 : i32
    return %arg0, %c0_i32 : i32, i32
  }
}

</mosaic_0001>

<llo_original>
// kernel: tpu_custom_call.1
$region0: #{tpu_custom_call.1}
  #allocation0 [shape = 'u32[]', space=smem, size = 0x4, offset = 0x4, fixed_abs, tag = 'smem constant byte address 0x4 - core index']
  #allocation1 [shape = 'u32[144,128]{1,0:T(1,128)}', space=vmem, size = 0x12000, scoped, tag = 'internal scratch']
  %s0 = inlined_call_operand.hbm [shape: f32[16,32], index: 0, kind: input, shape index: {}]
  %s1 = inlined_call_operand.vmem [shape: f32[1,32], index: 1, kind: input, shape index: {}]
  %s2 = inlined_call_operand.vmem [shape: f32[1,32], index: 2, kind: input, shape index: {}]
  %s3 = inlined_call_operand.hbm [shape: f32[16,32], index: 3, kind: output, shape index: {}]
  %s4 = sld [smem:[#allocation0]]
  $region26: #{tpu_custom_call.1} parent=0
    _
  %s6 = ssub.s32 1, %s4
  %s7 = scalar_select 0, %s6, %s4
  $region1: #{tpu_custom_call.1} parent=0
    #allocation2 [shape = 'u8[8192]{0}', space=vmem, size = 0x2000, scoped, tag = 'input window, operand 0, single buffered']
    #allocation3 [shape = 's32[1]{0}', space=sflag, size = 0x4, scoped, tag = 'scoped memory for tpu_custom_call.1']
    #allocation4 [shape = 's32[1]{0}', space=sflag, size = 0x4, scoped, tag = 'scoped memory for tpu_custom_call.1']
    #allocation5 [shape = 'u8[8192]{0}', space=vmem, size = 0x2000, scoped, tag = 'output window, operand 0, single buffered']
    %8 = vsyncpa [#allocation3], 0
    %9 = vsyncpa [#allocation4], 0
    // Predicated region
    $region2: #{tpu_custom_call.1} parent=1 // pred_check
      _
    $region3: #{tpu_custom_call.1} parent=1 // pred_check_branch
      %11 = sbr.rel (0) target = $region5
    $region4: #{tpu_custom_call.1} parent=1 // pred_region
      %s13 = ssub.s32 256, 256
      %14 = vsyncadd [#allocation3], %s13
      %s15 = sshll.u32 [#allocation2], 4
      %s16 = int_to_ptr.vmem [resolvable:$true] %s15
      %21 = dma.hbm_to_vmem [thread:$0]  %s0, 256, %s16, [#allocation3], 128, 128, 8
    $region5: #{tpu_custom_call.1} parent=1 // pred_fallthru
      _
    // Predicated region
    $region6: #{tpu_custom_call.1} parent=1 // pred_check
      _
    $region7: #{tpu_custom_call.1} parent=1 // pred_check_branch
      %23 = sbr.rel (0) target = $region9
    $region8: #{tpu_custom_call.1} parent=1 // pred_region
      _
    $region9: #{tpu_custom_call.1} parent=1 // pred_fallthru
      _
    // Predicated region
    $region10: #{tpu_custom_call.1} parent=1 // pred_check
      _
    $region11: #{tpu_custom_call.1} parent=1 // pred_check_branch
      %25 = sbr.rel (0) target = $region13
    $region12: #{tpu_custom_call.1} parent=1 // pred_region
      _
    $region13: #{tpu_custom_call.1} parent=1 // pred_fallthru
      _
    // Predicated region
    $region14: #{tpu_custom_call.1} parent=1 // pred_check
      _
    $region15: #{tpu_custom_call.1} parent=1 // pred_check_branch
      %27 = sbr.rel (0) target = $region17
    $region16: #{tpu_custom_call.1} parent=1 // pred_region
      %28 = dma.done [#allocation3], 256
    $region17: #{tpu_custom_call.1} parent=1 // pred_fallthru
      _
    %v29 = vld [vmem:[#allocation2] sm:$0xff]
    %v30 = vld [vmem:[#allocation2 + $0x8] sm:$0xff]
    %vm31 = vcmask 261120
    %v32 = vsel %vm31, %v29, 0.0
    %33 = vadd.xlane.f32.xlu0 %v32
    %v34 = vpop.xlane.xlu0 %33
    %v35 = vsel %vm31, %v30, 0.0
    %36 = vadd.xlane.f32.xlu0 %v35
    %v37 = vpop.xlane.xlu0 %36
    %v38 = vrcp.pop 32.0
    %v39 = vmul.f32 %v34, %v38
    %v40 = vmul.f32 %v37, %v38
    %v41 = vsub.f32 %v29, %v39
    %v42 = vsub.f32 %v30, %v40
    %v43 = vmul.f32 %v41, %v41
    %v44 = vmul.f32 %v42, %v42
    %v45 = vsel %vm31, %v43, 0.0
    %46 = vadd.xlane.f32.xlu0 %v45
    %v47 = vpop.xlane.xlu0 %46
    %v48 = vsel %vm31, %v44, 0.0
    %49 = vadd.xlane.f32.xlu0 %v48
    %v50 = vpop.xlane.xlu0 %49
    %v51 = vmul.f32 %v47, %v38
    %v52 = vmul.f32 %v50, %v38
    %v53 = vld [vmem:[%s1] sm:$0x1]
    %v54 = vld [vmem:[%s2] sm:$0x1]
    %v55 = vadd.f32 %v51, 1e-12
    %v56 = vadd.f32 %v52, 1e-12
    %v57 = vrsqrt.pop %v55
    %v58 = vrsqrt.pop %v56
    %v59 = vmul.f32 %v41, %v57
    %v60 = vmul.f32 %v42, %v58
    %v62 = vlaneseq
    %v63 = vshrl.u32 %v62, 7
    %v64 = vsub.s32 0, %v63
    %v65 = vrot.slane %v53, %v64
    %v67 = vmul.f32 %v65, %v59
    %v68 = vmul.f32 %v65, %v60
    %v70 = vlaneseq
    %v71 = vshrl.u32 %v70, 7
    %v72 = vsub.s32 0, %v71
    %v73 = vrot.slane %v54, %v72
    %v75 = vadd.f32 %v67, %v73
    %v76 = vadd.f32 %v68, %v73
    %77 = vst.msk [vmem:[#allocation5] sm:$0xff] %vm31, %v75
    %78 = vst.msk [vmem:[#allocation5 + $0x8] sm:$0xff] %vm31, %v76
    // Predicated region
    $region18: #{tpu_custom_call.1} parent=1 // pred_check
      _
    $region19: #{tpu_custom_call.1} parent=1 // pred_check_branch
      %80 = sbr.rel (0) target = $region21
    $region20: #{tpu_custom_call.1} parent=1 // pred_region
      %s82 = ssub.s32 256, 256
      %83 = vsyncadd [#allocation4], %s82
      %s84 = sshll.u32 [#allocation5], 4
      %s85 = int_to_ptr.vmem [resolvable:$true] %s84
      %90 = dma.vmem_to_hbm [thread:$0]  %s85, 256, %s3, [#allocation4], 128, 128, 8
    $region21: #{tpu_custom_call.1} parent=1 // pred_fallthru
      _
    // Predicated region
    $region22: #{tpu_custom_call.1} parent=1 // pred_check
      _
    $region23: #{tpu_custom_call.1} parent=1 // pred_check_branch
      %92 = sbr.rel (0) target = $region25
    $region24: #{tpu_custom_call.1} parent=1 // pred_region
      %93 = dma.done [#allocation4], 256
    $region25: #{tpu_custom_call.1} parent=1 // pred_fallthru
      _
    %94 = vsyncpa [#allocation3], 1
    %95 = vsyncpa [#allocation4], 1

</llo_original>
